<compile_context>
chip_gen: v5e
topology: v5e:2x2
jax: 0.10.0
libtpu: 0.0.40
codegen_flags: <defaults>
</compile_context>

<pallas_src>
import functools

import jax
import jax.numpy as jnp
from jax.experimental import pallas as pl
from jax.experimental.pallas import tpu as pltpu


def _dice_bce_partial_kernel(o_ref, t_ref, bce_ref, prod_ref, sum_ref, *,
                             rows_tile, r_valid, binary_target):
    """One (core, row-tile) step: accumulate per-(batch, lane) partial sums.

    o_ref, t_ref : (B, ROWS_TILE, 128) input blocks (any float dtype).
    bce_ref, prod_ref, sum_ref : (1, B, 128) f32 resident accumulators for
      the BCE terms, o*t and o+t; zeroed on the first reduction step.
    """
    c = pl.program_id(0)          # "core" (parallel) axis
    j = pl.program_id(1)          # row-tile (reduction) axis
    n_j = pl.num_programs(1)

    @pl.when(j == 0)
    def _init():
        bce_ref[...] = jnp.zeros_like(bce_ref)
        prod_ref[...] = jnp.zeros_like(prod_ref)
        sum_ref[...] = jnp.zeros_like(sum_ref)

    o = o_ref[...].astype(jnp.float32)
    t = t_ref[...].astype(jnp.float32)

    # Mask rows past the logical end (ragged last tile / grid over-run from
    # the multi-core split).  Masked elements become (o=0, t=0), which
    # contribute exactly zero to every partial sum below (including BCE:
    # t=0 -> -(0*log0_clamped + 1*log(1)) = 0).
    row_start = (c * n_j + j) * rows_tile
    row_idx = row_start + jax.lax.broadcasted_iota(jnp.int32, o.shape, 1)
    valid = row_idx < r_valid
    o = jnp.where(valid, o, 0.0)
    t = jnp.where(valid, t, 0.0)

    if binary_target:
        # Binary masks: one EUP log per element instead of two.
        p = jnp.where(t >= 0.5, o, 1.0 - o)
        bce_terms = -jnp.maximum(jnp.log(p), jnp.float32(-100.0))
    else:
        # Exact F.binary_cross_entropy semantics (soft targets, log clamped
        # at -100, reduction='mean' applied in the wrapper).
        log_o = jnp.maximum(jnp.log(o), jnp.float32(-100.0))
        log_1mo = jnp.maximum(jnp.log(1.0 - o), jnp.float32(-100.0))
        bce_terms = -(t * log_o + (1.0 - t) * log_1mo)

    # Sublane-direction reductions only; the expensive cross-lane reduce
    # happens once, in the wrapper, on tiny (cores, B, 128) arrays.
    bce_ref[...] += jnp.sum(bce_terms, axis=1)[None]
    prod_ref[...] += jnp.sum(o * t, axis=1)[None]
    sum_ref[...] += jnp.sum(o + t, axis=1)[None]


def dice_bce_loss(output, target, *, assume_binary_target=False):
    """JAX/Pallas equivalent of the PyTorch dice_bce_loss.forward."""
    assert output.shape == target.shape
    b = output.shape[0]
    o2 = output.reshape(b, -1)
    t2 = target.reshape(b, -1)
    n = o2.shape[1]

    # Pad the lane axis to a multiple of 128 only when needed (padded zeros
    # contribute nothing to any sum).  Reshapes are free; no dtype cast here.
    pad = (-n) % 128
    if pad:
        o2 = jnp.pad(o2, ((0, 0), (0, pad)))
        t2 = jnp.pad(t2, ((0, 0), (0, pad)))
    r = (n + pad) // 128
    o3 = o2.reshape(b, r, 128)
    t3 = t2.reshape(b, r, 128)

    # Row-tile size: ~2 MiB per input block per pipeline buffer, so
    # 2 inputs x 2 buffers stays far under every generation's scoped VMEM
    # (incl. the v5e 16 MiB default), while being large enough to amortize
    # per-grid-step overhead (~0.35 us) and approach the HBM roofline.
    itemsize = max(jnp.dtype(o3.dtype).itemsize, jnp.dtype(t3.dtype).itemsize)
    budget_rows = max(8, ((2 << 20) // (b * 128 * itemsize)) // 8 * 8)
    if r <= 8:
        rows_tile = r
    else:
        rows_tile = max(8, min((r // 8) * 8, budget_rows))

    n_tiles = pl.cdiv(r, rows_tile)
    # Megacore split across the leading "parallel" axis.  Collapse to one
    # core when there is a single tile so small inputs don't pay a wasted
    # (fully masked) extra block DMA; on 1-TC chips the second pass of the
    # parallel axis is just a sequential iteration.
    n_cores = 1 if n_tiles < 2 else 2
    tiles_per_core = pl.cdiv(n_tiles, n_cores)

    def in_map(c, j):
        blk = c * tiles_per_core + j
        # Clamp over-run tiles (their rows are fully masked inside the kernel).
        return (0, jnp.minimum(blk, n_tiles - 1), 0)

    acc_shape = jax.ShapeDtypeStruct((n_cores, b, 128), jnp.float32)
    acc_spec = pl.BlockSpec((1, b, 128), lambda c, j: (c, 0, 0))

    kernel = functools.partial(
        _dice_bce_partial_kernel,
        rows_tile=rows_tile, r_valid=r, binary_target=assume_binary_target)

    bce_part, prod_part, sum_part = pl.pallas_call(
        kernel,
        grid=(n_cores, tiles_per_core),
        in_specs=[pl.BlockSpec((b, rows_tile, 128), in_map),
                  pl.BlockSpec((b, rows_tile, 128), in_map)],
        out_specs=(acc_spec, acc_spec, acc_spec),
        out_shape=(acc_shape, acc_shape, acc_shape),
        compiler_params=pltpu.CompilerParams(
            dimension_semantics=("parallel", "arbitrary")),
    )(o3, t3)

    # Tiny finalize on (n_cores, B, 128) partials.
    smooth = jnp.float32(1e-4)
    bce = jnp.sum(bce_part) / jnp.float32(b * n)
    intersection = jnp.sum(prod_part, axis=(0, 2))   # (B,)
    union = jnp.sum(sum_part, axis=(0, 2))           # (B,)
    coff = (2.0 * intersection + smooth) / (union + smooth)
    dice = 1.0 - jnp.mean(coff)
    return bce + dice


if __name__ == "__main__":
    key = jax.random.PRNGKey(0)
    k_o, k_t = jax.random.split(key)

    B, C, H, W = 2, 4, 16, 16
    # "output" must be probabilities in (0, 1), like sigmoid activations.
    output = jax.nn.sigmoid(jax.random.normal(k_o, (B, C, H, W), jnp.float32))
    # "target" is a binary mask.
    target = (jax.random.uniform(k_t, (B, C, H, W)) > 0.5).astype(jnp.float32)

    loss = dice_bce_loss(output, target)                          # exact path
    loss_fast = dice_bce_loss(output, target, assume_binary_target=True)
    jax.block_until_ready((loss, loss_fast))

    # Pure-JAX reference (same semantics as the PyTorch module).
    o_flat = output.reshape(B, -1)
    t_flat = target.reshape(B, -1)
    smooth = 1e-4
    bce_ref = jnp.mean(
        -(t_flat * jnp.maximum(jnp.log(o_flat), -100.0)
          + (1.0 - t_flat) * jnp.maximum(jnp.log(1.0 - o_flat), -100.0)))
    inter = jnp.sum(o_flat * t_flat, axis=1)
    union = jnp.sum(o_flat, axis=1) + jnp.sum(t_flat, axis=1)
    dice_ref = 1.0 - jnp.mean((2.0 * inter + smooth) / (union + smooth))
    ref = bce_ref + dice_ref

    assert jnp.abs(loss - ref) < 1e-4, (loss, ref)
    assert jnp.abs(loss_fast - ref) < 1e-4, (loss_fast, ref)
    print("KERNEL_OK")
</pallas_src>

<mosaic_0001>
module attributes {stable_mosaic.version = 11 : i64} {
  func.func @_dice_bce_partial_kernel(%arg0: i32, %arg1: i32, %arg2: memref<2x8x128xf32, #tpu.memory_space<vmem>>, %arg3: memref<2x8x128xf32, #tpu.memory_space<vmem>>, %arg4: memref<1x2x128xf32, #tpu.memory_space<vmem>>, %arg5: memref<1x2x128xf32, #tpu.memory_space<vmem>>, %arg6: memref<1x2x128xf32, #tpu.memory_space<vmem>>) attributes {dimension_semantics = [#tpu.dimension_semantics<parallel>, #tpu.dimension_semantics<arbitrary>], iteration_bounds = array<i64: 1, 1>, scalar_prefetch = 0 : i64, scratch_operands = 0 : i64, tpu.core_type = #tpu.core_type<tc>, window_params = [{transform_indices = @transform_0, window_bounds = array<i64: 2, 8, 128>}, {transform_indices = @transform_1, window_bounds = array<i64: 2, 8, 128>}, {transform_indices = @transform_2, window_bounds = array<i64: 1, 2, 128>}, {transform_indices = @transform_3, window_bounds = array<i64: 1, 2, 128>}, {transform_indices = @transform_4, window_bounds = array<i64: 1, 2, 128>}]} {
    %c0_i32 = arith.constant 0 : i32
    %0 = arith.cmpi eq, %arg1, %c0_i32 : i32
    %1 = arith.extui %0 : i1 to i32
    %c0_i32_0 = arith.constant 0 : i32
    %2 = arith.cmpi ne, %1, %c0_i32_0 : i32
    scf.if %2 {
      %cst_34 = arith.constant 0.000000e+00 : f32
      %49 = vector.broadcast %cst_34 : f32 to vector<1x2x128xf32>
      %c0_35 = arith.constant 0 : index
      %c0_36 = arith.constant 0 : index
      %c0_37 = arith.constant 0 : index
      %50 = vector.load %arg4[%c0_35, %c0_36, %c0_37] : memref<1x2x128xf32, #tpu.memory_space<vmem>>, vector<1x2x128xf32>
      tpu.vector_store %arg4[%c0_35, %c0_36, %c0_37], %49 {strides = array<i32>} : memref<1x2x128xf32, #tpu.memory_space<vmem>>, vector<1x2x128xf32>,
      %cst_38 = arith.constant 0.000000e+00 : f32
      %51 = vector.broadcast %cst_38 : f32 to vector<1x2x128xf32>
      %c0_39 = arith.constant 0 : index
      %c0_40 = arith.constant 0 : index
      %c0_41 = arith.constant 0 : index
      %52 = vector.load %arg5[%c0_39, %c0_40, %c0_41] : memref<1x2x128xf32, #tpu.memory_space<vmem>>, vector<1x2x128xf32>
      tpu.vector_store %arg5[%c0_39, %c0_40, %c0_41], %51 {strides = array<i32>} : memref<1x2x128xf32, #tpu.memory_space<vmem>>, vector<1x2x128xf32>,
      %cst_42 = arith.constant 0.000000e+00 : f32
      %53 = vector.broadcast %cst_42 : f32 to vector<1x2x128xf32>
      %c0_43 = arith.constant 0 : index
      %c0_44 = arith.constant 0 : index
      %c0_45 = arith.constant 0 : index
      %54 = vector.load %arg6[%c0_43, %c0_44, %c0_45] : memref<1x2x128xf32, #tpu.memory_space<vmem>>, vector<1x2x128xf32>
      tpu.vector_store %arg6[%c0_43, %c0_44, %c0_45], %53 {strides = array<i32>} : memref<1x2x128xf32, #tpu.memory_space<vmem>>, vector<1x2x128xf32>,
    } else {
    }
    %c0 = arith.constant 0 : index
    %c0_1 = arith.constant 0 : index
    %c0_2 = arith.constant 0 : index
    %3 = vector.load %arg2[%c0, %c0_1, %c0_2] : memref<2x8x128xf32, #tpu.memory_space<vmem>>, vector<2x8x128xf32>
    %c0_3 = arith.constant 0 : index
    %c0_4 = arith.constant 0 : index
    %c0_5 = arith.constant 0 : index
    %4 = vector.load %arg3[%c0_3, %c0_4, %c0_5] : memref<2x8x128xf32, #tpu.memory_space<vmem>>, vector<2x8x128xf32>
    %c1_i32 = arith.constant 1 : i32
    %5 = arith.muli %arg0, %c1_i32 : i32
    %6 = arith.addi %5, %arg1 : i32
    %c8_i32 = arith.constant 8 : i32
    %7 = arith.muli %6, %c8_i32 : i32
    %8 = tpu.iota {dimensions = array<i32: 1>} : vector<2x8x128xi32>
    %9 = vector.broadcast %7 : i32 to vector<2x8x128xi32>
    %10 = arith.addi %9, %8 : vector<2x8x128xi32>
    %c8_i32_6 = arith.constant 8 : i32
    %11 = vector.broadcast %c8_i32_6 : i32 to vector<2x8x128xi32>
    %12 = arith.cmpi slt, %10, %11 : vector<2x8x128xi32>
    %cst = arith.constant 0.000000e+00 : f32
    %13 = vector.broadcast %cst : f32 to vector<2x8x128xf32>
    %14 = arith.select %12, %3, %13 : vector<2x8x128xi1>, vector<2x8x128xf32>
    %cst_7 = arith.constant 0.000000e+00 : f32
    %15 = vector.broadcast %cst_7 : f32 to vector<2x8x128xf32>
    %16 = arith.select %12, %4, %15 : vector<2x8x128xi1>, vector<2x8x128xf32>
    %17 = math.log %14 : vector<2x8x128xf32>
    %cst_8 = arith.constant -1.000000e+02 : f32
    %18 = vector.broadcast %cst_8 : f32 to vector<2x8x128xf32>
    %19 = arith.maximumf %17, %18 : vector<2x8x128xf32>
    %cst_9 = arith.constant 1.000000e+00 : f32
    %20 = vector.broadcast %cst_9 : f32 to vector<2x8x128xf32>
    %21 = arith.subf %20, %14 : vector<2x8x128xf32>
    %22 = math.log %21 : vector<2x8x128xf32>
    %cst_10 = arith.constant -1.000000e+02 : f32
    %23 = vector.broadcast %cst_10 : f32 to vector<2x8x128xf32>
    %24 = arith.maximumf %22, %23 : vector<2x8x128xf32>
    %25 = arith.mulf %16, %19 : vector<2x8x128xf32>
    %cst_11 = arith.constant 1.000000e+00 : f32
    %26 = vector.broadcast %cst_11 : f32 to vector<2x8x128xf32>
    %27 = arith.subf %26, %16 : vector<2x8x128xf32>
    %28 = arith.mulf %27, %24 : vector<2x8x128xf32>
    %29 = arith.addf %25, %28 : vector<2x8x128xf32>
    %cst_12 = arith.constant 0.000000e+00 : f32
    %30 = vector.broadcast %cst_12 : f32 to vector<2x8x128xf32>
    %31 = arith.subf %30, %29 : vector<2x8x128xf32>
    %c0_13 = arith.constant 0 : index
    %c0_14 = arith.constant 0 : index
    %c0_15 = arith.constant 0 : index
    %32 = vector.load %arg4[%c0_13, %c0_14, %c0_15] : memref<1x2x128xf32, #tpu.memory_space<vmem>>, vector<1x2x128xf32>
    %cst_16 = arith.constant dense<0.000000e+00> : vector<2x128xf32>
    %33 = vector.multi_reduction <add>, %31, %cst_16 [1] : vector<2x8x128xf32> to vector<2x128xf32>
    %34 = vector.shape_cast %33 : vector<2x128xf32> to vector<1x2x128xf32>
    %35 = arith.addf %32, %34 : vector<1x2x128xf32>
    %c0_17 = arith.constant 0 : index
    %c0_18 = arith.constant 0 : index
    %c0_19 = arith.constant 0 : index
    %36 = vector.load %arg4[%c0_17, %c0_18, %c0_19] : memref<1x2x128xf32, #tpu.memory_space<vmem>>, vector<1x2x128xf32>
    tpu.vector_store %arg4[%c0_17, %c0_18, %c0_19], %35 {strides = array<i32>} : memref<1x2x128xf32, #tpu.memory_space<vmem>>, vector<1x2x128xf32>,
    %c0_20 = arith.constant 0 : index
    %c0_21 = arith.constant 0 : index
    %c0_22 = arith.constant 0 : index
    %37 = vector.load %arg5[%c0_20, %c0_21, %c0_22] : memref<1x2x128xf32, #tpu.memory_space<vmem>>, vector<1x2x128xf32>
    %38 = arith.mulf %14, %16 : vector<2x8x128xf32>
    %cst_23 = arith.constant dense<0.000000e+00> : vector<2x128xf32>
    %39 = vector.multi_reduction <add>, %38, %cst_23 [1] : vector<2x8x128xf32> to vector<2x128xf32>
    %40 = vector.shape_cast %39 : vector<2x128xf32> to vector<1x2x128xf32>
    %41 = arith.addf %37, %40 : vector<1x2x128xf32>
    %c0_24 = arith.constant 0 : index
    %c0_25 = arith.constant 0 : index
    %c0_26 = arith.constant 0 : index
    %42 = vector.load %arg5[%c0_24, %c0_25, %c0_26] : memref<1x2x128xf32, #tpu.memory_space<vmem>>, vector<1x2x128xf32>
    tpu.vector_store %arg5[%c0_24, %c0_25, %c0_26], %41 {strides = array<i32>} : memref<1x2x128xf32, #tpu.memory_space<vmem>>, vector<1x2x128xf32>,
    %c0_27 = arith.constant 0 : index
    %c0_28 = arith.constant 0 : index
    %c0_29 = arith.constant 0 : index
    %43 = vector.load %arg6[%c0_27, %c0_28, %c0_29] : memref<1x2x128xf32, #tpu.memory_space<vmem>>, vector<1x2x128xf32>
    %44 = arith.addf %14, %16 : vector<2x8x128xf32>
    %cst_30 = arith.constant dense<0.000000e+00> : vector<2x128xf32>
    %45 = vector.multi_reduction <add>, %44, %cst_30 [1] : vector<2x8x128xf32> to vector<2x128xf32>
    %46 = vector.shape_cast %45 : vector<2x128xf32> to vector<1x2x128xf32>
    %47 = arith.addf %43, %46 : vector<1x2x128xf32>
    %c0_31 = arith.constant 0 : index
    %c0_32 = arith.constant 0 : index
    %c0_33 = arith.constant 0 : index
    %48 = vector.load %arg6[%c0_31, %c0_32, %c0_33] : memref<1x2x128xf32, #tpu.memory_space<vmem>>, vector<1x2x128xf32>
    tpu.vector_store %arg6[%c0_31, %c0_32, %c0_33], %47 {strides = array<i32>} : memref<1x2x128xf32, #tpu.memory_space<vmem>>, vector<1x2x128xf32>,
    return
  }
  func.func @transform_0(%arg0: i32, %arg1: i32) -> (i32, i32, i32) {
    %c1_i32 = arith.constant 1 : i32
    %0 = arith.muli %arg0, %c1_i32 : i32
    %1 = arith.addi %0, %arg1 : i32
    %c0_i32 = arith.constant 0 : i32
    %2 = arith.minsi %1, %c0_i32 : i32
    %c0_i32_0 = arith.constant 0 : i32
    %c0_i32_1 = arith.constant 0 : i32
    %c0_i32_2 = arith.constant 0 : i32
    return %c0_i32_0, %2, %c0_i32_1 : i32, i32, i32
  }
  func.func @transform_1(%arg0: i32, %arg1: i32) -> (i32, i32, i32) {
    %c1_i32 = arith.constant 1 : i32
    %0 = arith.muli %arg0, %c1_i32 : i32
    %1 = arith.addi %0, %arg1 : i32
    %c0_i32 = arith.constant 0 : i32
    %2 = arith.minsi %1, %c0_i32 : i32
    %c0_i32_0 = arith.constant 0 : i32
    %c0_i32_1 = arith.constant 0 : i32
    %c0_i32_2 = arith.constant 0 : i32
    return %c0_i32_0, %2, %c0_i32_1 : i32, i32, i32
  }
  func.func @transform_2(%arg0: i32, %arg1: i32) -> (i32, i32, i32) {
    %c0_i32 = arith.constant 0 : i32
    %c0_i32_0 = arith.constant 0 : i32
    %c0_i32_1 = arith.constant 0 : i32
    return %arg0, %c0_i32, %c0_i32_0 : i32, i32, i32
  }
  func.func @transform_3(%arg0: i32, %arg1: i32) -> (i32, i32, i32) {
    %c0_i32 = arith.constant 0 : i32
    %c0_i32_0 = arith.constant 0 : i32
    %c0_i32_1 = arith.constant 0 : i32
    return %arg0, %c0_i32, %c0_i32_0 : i32, i32, i32
  }
  func.func @transform_4(%arg0: i32, %arg1: i32) -> (i32, i32, i32) {
    %c0_i32 = arith.constant 0 : i32
    %c0_i32_0 = arith.constant 0 : i32
    %c0_i32_1 = arith.constant 0 : i32
    return %arg0, %c0_i32, %c0_i32_0 : i32, i32, i32
  }
}

</mosaic_0001>

<llo_original>
// kernel: tpu_custom_call.1
$region0: #{tpu_custom_call.1}
  #allocation0 [shape = 'u32[]', space=smem, size = 0x4, offset = 0x4, fixed_abs, tag = 'smem constant byte address 0x4 - core index']
  #allocation1 [shape = 'u32[72,128]{1,0:T(1,128)}', space=vmem, size = 0x9000, scoped, tag = 'internal scratch']
  %s0 = inlined_call_operand.hbm [shape: f32[2,8,128], index: 0, kind: input, shape index: {}]
  %s1 = inlined_call_operand.hbm [shape: f32[2,8,128], index: 1, kind: input, shape index: {}]
  %s2 = inlined_call_operand.hbm [shape: f32[1,2,128], index: 2, kind: output, shape index: {0}]
  %s3 = inlined_call_operand.hbm [shape: f32[1,2,128], index: 3, kind: output, shape index: {1}]
  %s4 = inlined_call_operand.hbm [shape: f32[1,2,128], index: 4, kind: output, shape index: {2}]
  %5 = xla_tuple %s2, %s3, %s4
  %s6 = sld [smem:[#allocation0]]
  $region46: #{tpu_custom_call.1} parent=0
    _
  %s8 = ssub.s32 1, %s6
  %s9 = scalar_select 0, %s8, %s6
  $region1: #{tpu_custom_call.1} parent=0
    #allocation2 [shape = 'u8[8192]{0}', space=vmem, size = 0x2000, scoped, tag = 'input window, operand 0, single buffered']
    #allocation3 [shape = 's32[1]{0}', space=sflag, size = 0x4, scoped, tag = 'scoped memory for tpu_custom_call.1']
    #allocation4 [shape = 's32[1]{0}', space=sflag, size = 0x4, scoped, tag = 'scoped memory for tpu_custom_call.1']
    #allocation5 [shape = 'u8[8192]{0}', space=vmem, size = 0x2000, scoped, tag = 'input window, operand 1, single buffered']
    #allocation6 [shape = 's32[1]{0}', space=sflag, size = 0x4, scoped, tag = 'scoped memory for tpu_custom_call.1']
    #allocation7 [shape = 'u8[1024]{0}', space=vmem, size = 0x400, scoped, tag = 'output window, operand 0, single buffered']
    #allocation8 [shape = 'u8[1024]{0}', space=vmem, size = 0x400, scoped, tag = 'output window, operand 1, single buffered']
    #allocation9 [shape = 's32[1]{0}', space=sflag, size = 0x4, scoped, tag = 'scoped memory for tpu_custom_call.1']
    #allocation10 [shape = 'u8[1024]{0}', space=vmem, size = 0x400, scoped, tag = 'output window, operand 2, single buffered']
    %10 = vsyncpa [#allocation3], 0
    %11 = vsyncpa [#allocation6], 0
    %12 = vsyncpa [#allocation4], 0
    %13 = vsyncpa [#allocation9], 0
    // Predicated region
    $region2: #{tpu_custom_call.1} parent=1 // pred_check
      _
    $region3: #{tpu_custom_call.1} parent=1 // pred_check_branch
      %15 = sbr.rel (0) target = $region5
    $region4: #{tpu_custom_call.1} parent=1 // pred_region
      %s16 = sadd.s32 0, 0
      %p17 = scmp.lt.s32.totalorder %s16, 0
      %s18 = scalar_select %p17, %s16, 0
      %20 = vsyncadd [#allocation3], 0
      %s21 = smul.addr %s18, 8
      %s22 = scalar_lea.hbm %s0, %s21
      %s23 = sshll.u32 %s22, 4
      %s24 = int_to_ptr.hbm [resolvable:$true] %s23
      %s25 = sshll.u32 [#allocation2], 4
      %s26 = int_to_ptr.vmem [resolvable:$true] %s25
      %31 = dma.hbm_to_vmem [thread:$0]  %s24, 256, %s26, [#allocation3], 128, 128, 8
    $region5: #{tpu_custom_call.1} parent=1 // pred_fallthru
      _
    // Predicated region
    $region6: #{tpu_custom_call.1} parent=1 // pred_check
      _
    $region7: #{tpu_custom_call.1} parent=1 // pred_check_branch
      %33 = sbr.rel (0) target = $region9
    $region8: #{tpu_custom_call.1} parent=1 // pred_region
      %s34 = sadd.s32 0, 0
      %p35 = scmp.lt.s32.totalorder %s34, 0
      %s36 = scalar_select %p35, %s34, 0
      %38 = vsyncadd [#allocation6], 0
      %s39 = smul.addr %s36, 8
      %s40 = scalar_lea.hbm %s1, %s39
      %s41 = sshll.u32 %s40, 4
      %s42 = int_to_ptr.hbm [resolvable:$true] %s41
      %s43 = sshll.u32 [#allocation5], 4
      %s44 = int_to_ptr.vmem [resolvable:$true] %s43
      %49 = dma.hbm_to_vmem [thread:$0]  %s42, 256, %s44, [#allocation6], 128, 128, 8
    $region9: #{tpu_custom_call.1} parent=1 // pred_fallthru
      _
    // Predicated region
    $region10: #{tpu_custom_call.1} parent=1 // pred_check
      _
    $region11: #{tpu_custom_call.1} parent=1 // pred_check_branch
      %51 = sbr.rel (0) target = $region13
    $region12: #{tpu_custom_call.1} parent=1 // pred_region
      %53 = dma.done [#allocation3], 256
    $region13: #{tpu_custom_call.1} parent=1 // pred_fallthru
      _
    // Predicated region
    $region14: #{tpu_custom_call.1} parent=1 // pred_check
      _
    $region15: #{tpu_custom_call.1} parent=1 // pred_check_branch
      %55 = sbr.rel (0) target = $region17
    $region16: #{tpu_custom_call.1} parent=1 // pred_region
      %57 = dma.done [#allocation6], 256
    $region17: #{tpu_custom_call.1} parent=1 // pred_fallthru
      _
    %s58 = sadd.s32 0, 0
    %p59 = scmp.lt.s32.totalorder %s58, 0
    %s60 = scalar_select %p59, %s58, 0
    %s61 = sadd.s32 0, 0
    %p62 = scmp.lt.s32.totalorder %s61, 0
    %s63 = scalar_select %p62, %s61, 0
    %p64 = scmp.eq.s32.totalorder 0, 0
    // Predicated region
    $region18: #{tpu_custom_call.1} parent=1 // pred_check
      %p65 = pneg %p64
    $region19: #{tpu_custom_call.1} parent=1 // pred_check_branch
      %67 = sbr.rel (%p65) target = $region21
    $region20: #{tpu_custom_call.1} parent=1 // pred_region
      %68 = vst [vmem:[#allocation7] sm:$0x3] 0.0
      %69 = vst [vmem:[#allocation8] sm:$0x3] 0.0
      %70 = vst [vmem:[#allocation10] sm:$0x3] 0.0
    $region21: #{tpu_custom_call.1} parent=1 // pred_fallthru
      _
    %v71 = vld [vmem:[#allocation2] sm:$0xff]
    %v72 = vld [vmem:[#allocation2 + $0x8] sm:$0xff]
    %v73 = vld [vmem:[#allocation5] sm:$0xff]
    %v74 = vld [vmem:[#allocation5 + $0x8] sm:$0xff]
    %s75 = sadd.s32 0, 0
    %s76 = smul.u32 %s75, 8
    %v77 = vlaneseq
    %v78 = vshrl.u32 %v77, 7
    %v79 = vstv %s76
    %v80 = vadd.s32 %v79, %v78
    %vm81 = vcmp.lt.s32.totalorder %v80, 8
    %v82 = vsel %vm81, %v71, 0.0
    %v83 = vsel %vm81, %v72, 0.0
    %v84 = vsel %vm81, %v73, 0.0
    %v85 = vsel %vm81, %v74, 0.0
    %v86 = vlog2.pop %v82
    %v87 = vmul.f32 %v86, 0.6931472
    %v88 = vlog2.pop %v83
    %v89 = vmul.f32 %v88, 0.6931472
    %v90 = vmax.f32 %v87, -100.0
    %v91 = vmax.f32 %v89, -100.0
    %v92 = vsub.f32 1.0, %v82
    %v93 = vsub.f32 1.0, %v83
    %v94 = vlog2.pop %v92
    %v95 = vmul.f32 %v94, 0.6931472
    %v96 = vlog2.pop %v93
    %v97 = vmul.f32 %v96, 0.6931472
    %v98 = vmax.f32 %v95, -100.0
    %v99 = vmax.f32 %v97, -100.0
    %v100 = vmul.f32 %v84, %v90
    %v101 = vmul.f32 %v85, %v91
    %v102 = vsub.f32 1.0, %v84
    %v103 = vsub.f32 1.0, %v85
    %v104 = vmul.f32 %v102, %v98
    %v105 = vmul.f32 %v103, %v99
    %v106 = vadd.f32 %v100, %v104
    %v107 = vadd.f32 %v101, %v105
    %v108 = vsub.f32 0.0, %v106
    %v109 = vsub.f32 0.0, %v107
    %v110 = vld [vmem:[#allocation7] sm:$0x3]
    %v111 = vrot.slane %v108, 4
    %v112 = vadd.f32 %v108, %v111
    %v113 = vrot.slane %v112, 2
    %v114 = vadd.f32 %v112, %v113
    %v115 = vrot.slane %v114, 1
    %v116 = vadd.f32 %v114, %v115
    %v117 = vrot.slane %v109, 4
    %v118 = vadd.f32 %v109, %v117
    %v119 = vrot.slane %v118, 2
    %v120 = vadd.f32 %v118, %v119
    %v121 = vrot.slane %v120, 1
    %v122 = vadd.f32 %v120, %v121
    %vm125 = vcmask 1041409
    %v126 = vsel %vm125, %v122, %v116
    %v128 = vadd.f32 %v110, %v126
    %129 = vst [vmem:[#allocation7] sm:$0x3] %v128
    %v130 = vld [vmem:[#allocation8] sm:$0x3]
    %v131 = vmul.f32 %v82, %v84
    %v132 = vmul.f32 %v83, %v85
    %v133 = vrot.slane %v131, 4
    %v134 = vadd.f32 %v131, %v133
    %v135 = vrot.slane %v134, 2
    %v136 = vadd.f32 %v134, %v135
    %v137 = vrot.slane %v136, 1
    %v138 = vadd.f32 %v136, %v137
    %v139 = vrot.slane %v132, 4
    %v140 = vadd.f32 %v132, %v139
    %v141 = vrot.slane %v140, 2
    %v142 = vadd.f32 %v140, %v141
    %v143 = vrot.slane %v142, 1
    %v144 = vadd.f32 %v142, %v143
    %v147 = vsel %vm125, %v144, %v138
    %v149 = vadd.f32 %v130, %v147
    %150 = vst [vmem:[#allocation8] sm:$0x3] %v149
    %v151 = vld [vmem:[#allocation10] sm:$0x3]
    %v152 = vadd.f32 %v82, %v84
    %v153 = vadd.f32 %v83, %v85
    %v154 = vrot.slane %v152, 4
    %v155 = vadd.f32 %v152, %v154
    %v156 = vrot.slane %v155, 2
    %v157 = vadd.f32 %v155, %v156
    %v158 = vrot.slane %v157, 1
    %v159 = vadd.f32 %v157, %v158
    %v160 = vrot.slane %v153, 4
    %v161 = vadd.f32 %v153, %v160
    %v162 = vrot.slane %v161, 2
    %v163 = vadd.f32 %v161, %v162
    %v164 = vrot.slane %v163, 1
    %v165 = vadd.f32 %v163, %v164
    %v168 = vsel %vm125, %v165, %v159
    %v170 = vadd.f32 %v151, %v168
    %171 = vst [vmem:[#allocation10] sm:$0x3] %v170
    // Predicated region
    $region22: #{tpu_custom_call.1} parent=1 // pred_check
      _
    $region23: #{tpu_custom_call.1} parent=1 // pred_check_branch
      %173 = sbr.rel (0) target = $region25
    $region24: #{tpu_custom_call.1} parent=1 // pred_region
      %175 = vsyncadd [#allocation4], 0
      %s177 = sshll.u32 [#allocation7], 4
      %s178 = int_to_ptr.vmem [resolvable:$true] %s177
      %s179 = sshll.u32 %s2, 4
      %s180 = int_to_ptr.hbm [resolvable:$true] %s179
      %182 = dma.vmem_to_hbm [thread:$0]  %s178, 32, %s180, [#allocation4]
    $region25: #{tpu_custom_call.1} parent=1 // pred_fallthru
      _
    // Predicated region
    $region26: #{tpu_custom_call.1} parent=1 // pred_check
      _
    $region27: #{tpu_custom_call.1} parent=1 // pred_check_branch
      %184 = sbr.rel (0) target = $region29
    $region28: #{tpu_custom_call.1} parent=1 // pred_region
      %186 = vsyncadd [#allocation9], 0
      %s188 = sshll.u32 [#allocation8], 4
      %s189 = int_to_ptr.vmem [resolvable:$true] %s188
      %s190 = sshll.u32 %s3, 4
      %s191 = int_to_ptr.hbm [resolvable:$true] %s190
      %193 = dma.vmem_to_hbm [thread:$0]  %s189, 32, %s191, [#allocation9]
    $region29: #{tpu_custom_call.1} parent=1 // pred_fallthru
      _
    // Predicated region
    $region30: #{tpu_custom_call.1} parent=1 // pred_check
      _
    $region31: #{tpu_custom_call.1} parent=1 // pred_check_branch
      %195 = sbr.rel (0) target = $region33
    $region32: #{tpu_custom_call.1} parent=1 // pred_region
      %197 = vsyncadd [#allocation9], 0
      %s199 = sshll.u32 [#allocation10], 4
      %s200 = int_to_ptr.vmem [resolvable:$true] %s199
      %s201 = sshll.u32 %s4, 4
      %s202 = int_to_ptr.hbm [resolvable:$true] %s201
      %204 = dma.vmem_to_hbm [thread:$0]  %s200, 32, %s202, [#allocation9]
    $region33: #{tpu_custom_call.1} parent=1 // pred_fallthru
      _
    // Predicated region
    $region34: #{tpu_custom_call.1} parent=1 // pred_check
      _
    $region35: #{tpu_custom_call.1} parent=1 // pred_check_branch
      %206 = sbr.rel (0) target = $region37
    $region36: #{tpu_custom_call.1} parent=1 // pred_region
      %208 = dma.done [#allocation4], 32
    $region37: #{tpu_custom_call.1} parent=1 // pred_fallthru
      _
    // Predicated region
    $region38: #{tpu_custom_call.1} parent=1 // pred_check
      _
    $region39: #{tpu_custom_call.1} parent=1 // pred_check_branch
      %210 = sbr.rel (0) target = $region41
    $region40: #{tpu_custom_call.1} parent=1 // pred_region
      %212 = dma.done [#allocation9], 32
    $region41: #{tpu_custom_call.1} parent=1 // pred_fallthru
      _
    // Predicated region
    $region42: #{tpu_custom_call.1} parent=1 // pred_check
      _
    $region43: #{tpu_custom_call.1} parent=1 // pred_check_branch
      %214 = sbr.rel (0) target = $region45
    $region44: #{tpu_custom_call.1} parent=1 // pred_region
      %216 = dma.done [#allocation9], 32
    $region45: #{tpu_custom_call.1} parent=1 // pred_fallthru
      _
    %217 = vsyncpa [#allocation3], 1
    %218 = vsyncpa [#allocation6], 1
    %219 = vsyncpa [#allocation4], 1
    %220 = vsyncpa [#allocation9], 1

</llo_original>
